<compile_context>
chip_gen: v6e
topology: v6e:2x2x1
jax: 0.10.0
libtpu: 0.0.40
codegen_flags: <defaults>
</compile_context>

<pallas_src>
import functools
import math

import jax
import jax.numpy as jnp
from jax import lax
from jax.experimental import pallas as pl
from jax.experimental.pallas import tpu as pltpu

_LANES = 128
_MAX_BLOCK_ROWS = 4096  # (4096, 128) f32 = 2 MiB per input block


def _depth_l1_kernel(pred_ref, gt_ref, sum_ref, cnt_ref, *,
                     eps, block_rows, valid_rows, last_lanes):
    c = pl.program_id(0)              # core / parallel slice
    i = pl.program_id(1)              # reduction step within the slice
    steps_per_core = pl.num_programs(1)

    @pl.when(i == 0)
    def _():
        sum_ref[...] = jnp.zeros_like(sum_ref)
        cnt_ref[...] = jnp.zeros_like(cnt_ref)

    # Load in native dtype, cast to f32 in vregs (free on VPU).
    p = pred_ref[...].astype(jnp.float32)
    g = gt_ref[...].astype(jnp.float32)

    # In-bounds mask for the ragged tail (rows past the real data, and the
    # partially-filled last row of the flattened tensor).
    row0 = (c * steps_per_core + i) * block_rows
    row_ids = row0 + lax.broadcasted_iota(jnp.int32, (block_rows, _LANES), 0)
    lane_ids = lax.broadcasted_iota(jnp.int32, (block_rows, _LANES), 1)
    in_bounds = (row_ids < valid_rows - 1) | (
        (row_ids == valid_rows - 1) & (lane_ids < last_lanes))

    mask = in_bounds & (g > eps)
    absdiff = jnp.where(mask, jnp.abs(p - g), 0.0)
    cnt = mask.astype(jnp.float32)

    # Fold (block_rows, 128) -> (8, 128): vreg-wise VPU adds, no cross-lane
    # XLU reduce in the hot loop.  The output block stays VMEM-resident
    # across the "arbitrary" axis, so these += are accumulator updates.
    sum_ref[...] += jnp.sum(absdiff.reshape(block_rows // 8, 8, _LANES), axis=0)
    cnt_ref[...] += jnp.sum(cnt.reshape(block_rows // 8, 8, _LANES), axis=0)


def depth_l1_loss(pred, gt, eps=1e-5, max_block_rows=_MAX_BLOCK_ROWS,
                  num_cores=2):
    """Masked L1 loss matching DepthL1Loss.forward (PyTorch, NCHW inputs)."""
    assert pred.shape == gt.shape
    bs = pred.shape[0]
    total = math.prod(pred.shape)

    # Geometry of the flattened (rows, 128) view of the real data.
    valid_rows = -(-total // _LANES)                      # rows holding data
    last_lanes = total - (valid_rows - 1) * _LANES        # lanes in last row
    rows = -(-valid_rows // 8) * 8                        # array rows (mult of 8)

    pred_f = pred.reshape(-1)
    gt_f = gt.reshape(-1)
    pad = rows * _LANES - total
    if pad:
        # Rare: only when total isn't a multiple of 8*128.  The padded tail is
        # excluded in-kernel by the bounds mask (independent of eps's sign).
        pred_f = jnp.pad(pred_f, (0, pad))
        gt_f = jnp.pad(gt_f, (0, pad))
    pred2d = pred_f.reshape(rows, _LANES)
    gt2d = gt_f.reshape(rows, _LANES)

    block_rows = min(max_block_rows, rows)                # multiple of 8
    steps_total = -(-rows // block_rows)
    n_cores = num_cores if steps_total >= num_cores else 1
    steps_per_core = -(-steps_total // n_cores)
    last_block = steps_total - 1

    def in_map(c, i):
        # Clamp so an overhanging step on the last core never issues an
        # out-of-range block DMA; its rows are fully masked in-kernel.
        return (jnp.minimum(c * steps_per_core + i, last_block), 0)

    kernel = functools.partial(
        _depth_l1_kernel, eps=eps, block_rows=block_rows,
        valid_rows=valid_rows, last_lanes=last_lanes)

    sum_parts, cnt_parts = pl.pallas_call(
        kernel,
        out_shape=(
            jax.ShapeDtypeStruct((n_cores * 8, _LANES), jnp.float32),
            jax.ShapeDtypeStruct((n_cores * 8, _LANES), jnp.float32),
        ),
        grid_spec=pltpu.PrefetchScalarGridSpec(
            num_scalar_prefetch=0,
            grid=(n_cores, steps_per_core),
            in_specs=[
                pl.BlockSpec((block_rows, _LANES), in_map),
                pl.BlockSpec((block_rows, _LANES), in_map),
            ],
            out_specs=[
                pl.BlockSpec((8, _LANES), lambda c, i: (c, 0)),
                pl.BlockSpec((8, _LANES), lambda c, i: (c, 0)),
            ],
        ),
        compiler_params=pltpu.CompilerParams(
            dimension_semantics=("parallel", "arbitrary"),
        ),
    )(pred2d, gt2d)

    # loss = sum(|pred-gt| over masked elems) / mask.sum() * bs
    return (jnp.sum(sum_parts) / jnp.sum(cnt_parts)) * jnp.float32(bs)


def _reference(pred, gt, eps=1e-5):
    mask = gt > eps
    a = jnp.where(mask, pred, 0.0)
    b = jnp.where(mask, gt, 0.0)
    return jnp.sum(jnp.abs(a - b)) / jnp.sum(mask.astype(jnp.float32)) * pred.shape[0]


if __name__ == "__main__":
    key = jax.random.PRNGKey(0)
    k1, k2, k3 = jax.random.split(key, 3)
    B, C, H, W = 2, 4, 16, 16
    pred = jax.random.uniform(k1, (B, C, H, W), dtype=jnp.float32) * 5.0
    gt = jax.random.uniform(k2, (B, C, H, W), dtype=jnp.float32) * 5.0
    # Make some gt entries invalid (<= eps) to exercise the mask.
    invalid = jax.random.bernoulli(k3, p=0.3, shape=(B, C, H, W))
    gt = jnp.where(invalid, 0.0, gt)

    loss = depth_l1_loss(pred, gt)
    jax.block_until_ready(loss)

    ref = _reference(pred, gt)
    assert jnp.allclose(loss, ref, rtol=1e-5, atol=1e-5), (loss, ref)
    print("KERNEL_OK")
</pallas_src>

<mosaic_0001>
module attributes {stable_mosaic.version = 11 : i64} {
  func.func @_depth_l1_kernel(%arg0: i32, %arg1: i32, %arg2: memref<16x128xf32, #tpu.memory_space<vmem>>, %arg3: memref<16x128xf32, #tpu.memory_space<vmem>>, %arg4: memref<8x128xf32, #tpu.memory_space<vmem>>, %arg5: memref<8x128xf32, #tpu.memory_space<vmem>>) attributes {dimension_semantics = [#tpu.dimension_semantics<parallel>, #tpu.dimension_semantics<arbitrary>], iteration_bounds = array<i64: 1, 1>, scalar_prefetch = 0 : i64, scratch_operands = 0 : i64, tpu.core_type = #tpu.core_type<tc>, window_params = [{transform_indices = @transform_0, window_bounds = array<i64: 16, 128>}, {transform_indices = @transform_1, window_bounds = array<i64: 16, 128>}, {transform_indices = @transform_2, window_bounds = array<i64: 8, 128>}, {transform_indices = @transform_3, window_bounds = array<i64: 8, 128>}]} {
    %c0_i32 = arith.constant 0 : i32
    %0 = arith.cmpi eq, %arg1, %c0_i32 : i32
    %1 = arith.extui %0 : i1 to i32
    %c0_i32_0 = arith.constant 0 : i32
    %2 = arith.cmpi ne, %1, %c0_i32_0 : i32
    scf.if %2 {
      %cst_16 = arith.constant 0.000000e+00 : f32
      %39 = vector.broadcast %cst_16 : f32 to vector<8x128xf32>
      %c0_17 = arith.constant 0 : index
      %c0_18 = arith.constant 0 : index
      %40 = vector.load %arg4[%c0_17, %c0_18] : memref<8x128xf32, #tpu.memory_space<vmem>>, vector<8x128xf32>
      tpu.vector_store %arg4[%c0_17, %c0_18], %39 {strides = array<i32>} : memref<8x128xf32, #tpu.memory_space<vmem>>, vector<8x128xf32>,
      %cst_19 = arith.constant 0.000000e+00 : f32
      %41 = vector.broadcast %cst_19 : f32 to vector<8x128xf32>
      %c0_20 = arith.constant 0 : index
      %c0_21 = arith.constant 0 : index
      %42 = vector.load %arg5[%c0_20, %c0_21] : memref<8x128xf32, #tpu.memory_space<vmem>>, vector<8x128xf32>
      tpu.vector_store %arg5[%c0_20, %c0_21], %41 {strides = array<i32>} : memref<8x128xf32, #tpu.memory_space<vmem>>, vector<8x128xf32>,
    } else {
    }
    %c0 = arith.constant 0 : index
    %c0_1 = arith.constant 0 : index
    %3 = vector.load %arg2[%c0, %c0_1] : memref<16x128xf32, #tpu.memory_space<vmem>>, vector<16x128xf32>
    %c0_2 = arith.constant 0 : index
    %c0_3 = arith.constant 0 : index
    %4 = vector.load %arg3[%c0_2, %c0_3] : memref<16x128xf32, #tpu.memory_space<vmem>>, vector<16x128xf32>
    %c1_i32 = arith.constant 1 : i32
    %5 = arith.muli %arg0, %c1_i32 : i32
    %6 = arith.addi %5, %arg1 : i32
    %c16_i32 = arith.constant 16 : i32
    %7 = arith.muli %6, %c16_i32 : i32
    %8 = tpu.iota {dimensions = array<i32: 0>} : vector<16x128xi32>
    %9 = vector.broadcast %7 : i32 to vector<16x128xi32>
    %10 = arith.addi %9, %8 : vector<16x128xi32>
    %11 = tpu.iota {dimensions = array<i32: 1>} : vector<16x128xi32>
    %c15_i32 = arith.constant 15 : i32
    %12 = vector.broadcast %c15_i32 : i32 to vector<16x128xi32>
    %13 = arith.cmpi slt, %10, %12 : vector<16x128xi32>
    %c15_i32_4 = arith.constant 15 : i32
    %14 = vector.broadcast %c15_i32_4 : i32 to vector<16x128xi32>
    %15 = arith.cmpi eq, %10, %14 : vector<16x128xi32>
    %c128_i32 = arith.constant 128 : i32
    %16 = vector.broadcast %c128_i32 : i32 to vector<16x128xi32>
    %17 = arith.cmpi slt, %11, %16 : vector<16x128xi32>
    %18 = arith.andi %15, %17 : vector<16x128xi1>
    %19 = arith.ori %13, %18 : vector<16x128xi1>
    %cst = arith.constant 9.99999974E-6 : f32
    %20 = vector.broadcast %cst : f32 to vector<16x128xf32>
    %21 = arith.cmpf ogt, %4, %20 : vector<16x128xf32>
    %22 = arith.andi %19, %21 : vector<16x128xi1>
    %23 = arith.subf %3, %4 : vector<16x128xf32>
    %24 = math.absf %23 : vector<16x128xf32>
    %cst_5 = arith.constant 0.000000e+00 : f32
    %25 = vector.broadcast %cst_5 : f32 to vector<16x128xf32>
    %26 = arith.select %22, %24, %25 : vector<16x128xi1>, vector<16x128xf32>
    %27 = arith.extui %22 : vector<16x128xi1> to vector<16x128xi32>
    %28 = arith.sitofp %27 : vector<16x128xi32> to vector<16x128xf32>
    %c0_6 = arith.constant 0 : index
    %c0_7 = arith.constant 0 : index
    %29 = vector.load %arg4[%c0_6, %c0_7] : memref<8x128xf32, #tpu.memory_space<vmem>>, vector<8x128xf32>
    %30 = vector.shape_cast %26 : vector<16x128xf32> to vector<2x8x128xf32>
    %cst_8 = arith.constant dense<0.000000e+00> : vector<8x128xf32>
    %31 = vector.multi_reduction <add>, %30, %cst_8 [0] : vector<2x8x128xf32> to vector<8x128xf32>
    %32 = arith.addf %29, %31 : vector<8x128xf32>
    %c0_9 = arith.constant 0 : index
    %c0_10 = arith.constant 0 : index
    %33 = vector.load %arg4[%c0_9, %c0_10] : memref<8x128xf32, #tpu.memory_space<vmem>>, vector<8x128xf32>
    tpu.vector_store %arg4[%c0_9, %c0_10], %32 {strides = array<i32>} : memref<8x128xf32, #tpu.memory_space<vmem>>, vector<8x128xf32>,
    %c0_11 = arith.constant 0 : index
    %c0_12 = arith.constant 0 : index
    %34 = vector.load %arg5[%c0_11, %c0_12] : memref<8x128xf32, #tpu.memory_space<vmem>>, vector<8x128xf32>
    %35 = vector.shape_cast %28 : vector<16x128xf32> to vector<2x8x128xf32>
    %cst_13 = arith.constant dense<0.000000e+00> : vector<8x128xf32>
    %36 = vector.multi_reduction <add>, %35, %cst_13 [0] : vector<2x8x128xf32> to vector<8x128xf32>
    %37 = arith.addf %34, %36 : vector<8x128xf32>
    %c0_14 = arith.constant 0 : index
    %c0_15 = arith.constant 0 : index
    %38 = vector.load %arg5[%c0_14, %c0_15] : memref<8x128xf32, #tpu.memory_space<vmem>>, vector<8x128xf32>
    tpu.vector_store %arg5[%c0_14, %c0_15], %37 {strides = array<i32>} : memref<8x128xf32, #tpu.memory_space<vmem>>, vector<8x128xf32>,
    return
  }
  func.func @transform_0(%arg0: i32, %arg1: i32) -> (i32, i32) {
    %c1_i32 = arith.constant 1 : i32
    %0 = arith.muli %arg0, %c1_i32 : i32
    %1 = arith.addi %0, %arg1 : i32
    %c0_i32 = arith.constant 0 : i32
    %2 = arith.minsi %1, %c0_i32 : i32
    %c0_i32_0 = arith.constant 0 : i32
    %c0_i32_1 = arith.constant 0 : i32
    return %2, %c0_i32_0 : i32, i32
  }
  func.func @transform_1(%arg0: i32, %arg1: i32) -> (i32, i32) {
    %c1_i32 = arith.constant 1 : i32
    %0 = arith.muli %arg0, %c1_i32 : i32
    %1 = arith.addi %0, %arg1 : i32
    %c0_i32 = arith.constant 0 : i32
    %2 = arith.minsi %1, %c0_i32 : i32
    %c0_i32_0 = arith.constant 0 : i32
    %c0_i32_1 = arith.constant 0 : i32
    return %2, %c0_i32_0 : i32, i32
  }
  func.func @transform_2(%arg0: i32, %arg1: i32) -> (i32, i32) {
    %c0_i32 = arith.constant 0 : i32
    %c0_i32_0 = arith.constant 0 : i32
    return %arg0, %c0_i32 : i32, i32
  }
  func.func @transform_3(%arg0: i32, %arg1: i32) -> (i32, i32) {
    %c0_i32 = arith.constant 0 : i32
    %c0_i32_0 = arith.constant 0 : i32
    return %arg0, %c0_i32 : i32, i32
  }
}

</mosaic_0001>

<llo_original>
// kernel: tpu_custom_call.1
$region0: #{tpu_custom_call.1}
  #allocation0 [shape = 'u32[]', space=smem, size = 0x4, offset = 0x4, fixed_abs, tag = 'smem constant byte address 0x4 - core index']
  #allocation1 [shape = 'u32[144,128]{1,0:T(1,128)}', space=vmem, size = 0x12000, scoped, tag = 'internal scratch']
  %s0 = inlined_call_operand.hbm [shape: f32[16,128], index: 0, kind: input, shape index: {}]
  %s1 = inlined_call_operand.hbm [shape: f32[16,128], index: 1, kind: input, shape index: {}]
  %s2 = inlined_call_operand.hbm [shape: f32[8,128], index: 2, kind: output, shape index: {0}]
  %s3 = inlined_call_operand.hbm [shape: f32[8,128], index: 3, kind: output, shape index: {1}]
  %4 = xla_tuple %s2, %s3
  %s5 = sld [smem:[#allocation0]]
  $region38: #{tpu_custom_call.1} parent=0
    _
  %s7 = ssub.s32 1, %s5
  %s8 = scalar_select 0, %s7, %s5
  $region1: #{tpu_custom_call.1} parent=0
    #allocation2 [shape = 'u8[8192]{0}', space=vmem, size = 0x2000, scoped, tag = 'input window, operand 0, single buffered']
    #allocation3 [shape = 's32[1]{0}', space=sflag, size = 0x4, scoped, tag = 'scoped memory for tpu_custom_call.1']
    #allocation4 [shape = 's32[1]{0}', space=sflag, size = 0x4, scoped, tag = 'scoped memory for tpu_custom_call.1']
    #allocation5 [shape = 'u8[8192]{0}', space=vmem, size = 0x2000, scoped, tag = 'input window, operand 1, single buffered']
    #allocation6 [shape = 's32[1]{0}', space=sflag, size = 0x4, scoped, tag = 'scoped memory for tpu_custom_call.1']
    #allocation7 [shape = 'u8[4096]{0}', space=vmem, size = 0x1000, scoped, tag = 'output window, operand 0, single buffered']
    #allocation8 [shape = 'u8[4096]{0}', space=vmem, size = 0x1000, scoped, tag = 'output window, operand 1, single buffered']
    #allocation9 [shape = 's32[1]{0}', space=sflag, size = 0x4, scoped, tag = 'scoped memory for tpu_custom_call.1']
    %9 = vsyncpa [#allocation3], 0
    %10 = vsyncpa [#allocation6], 0
    %11 = vsyncpa [#allocation4], 0
    %12 = vsyncpa [#allocation9], 0
    // Predicated region
    $region2: #{tpu_custom_call.1} parent=1 // pred_check
      _
    $region3: #{tpu_custom_call.1} parent=1 // pred_check_branch
      %14 = sbr.rel (0) target = $region5
    $region4: #{tpu_custom_call.1} parent=1 // pred_region
      %s15 = sadd.s32 0, 0
      %p16 = scmp.lt.s32.totalorder %s15, 0
      %s17 = scalar_select %p16, %s15, 0
      %s18 = smul.u32 2, %s17
      %s20 = ssub.s32 256, 256
      %21 = vsyncadd [#allocation3], %s20
      %s22 = smul.addr %s18, 128
      %s23 = scalar_lea.hbm %s0, %s22
      %s24 = sshll.u32 [#allocation2], 4
      %s25 = int_to_ptr.vmem [resolvable:$true] %s24
      %30 = dma.hbm_to_vmem [thread:$0]  %s23, 256, %s25, [#allocation3], 128, 128, 8
    $region5: #{tpu_custom_call.1} parent=1 // pred_fallthru
      _
    // Predicated region
    $region6: #{tpu_custom_call.1} parent=1 // pred_check
      _
    $region7: #{tpu_custom_call.1} parent=1 // pred_check_branch
      %32 = sbr.rel (0) target = $region9
    $region8: #{tpu_custom_call.1} parent=1 // pred_region
      %s33 = sadd.s32 0, 0
      %p34 = scmp.lt.s32.totalorder %s33, 0
      %s35 = scalar_select %p34, %s33, 0
      %s36 = smul.u32 2, %s35
      %s38 = ssub.s32 256, 256
      %39 = vsyncadd [#allocation6], %s38
      %s40 = smul.addr %s36, 128
      %s41 = scalar_lea.hbm %s1, %s40
      %s42 = sshll.u32 [#allocation5], 4
      %s43 = int_to_ptr.vmem [resolvable:$true] %s42
      %48 = dma.hbm_to_vmem [thread:$0]  %s41, 256, %s43, [#allocation6], 128, 128, 8
    $region9: #{tpu_custom_call.1} parent=1 // pred_fallthru
      _
    // Predicated region
    $region10: #{tpu_custom_call.1} parent=1 // pred_check
      _
    $region11: #{tpu_custom_call.1} parent=1 // pred_check_branch
      %50 = sbr.rel (0) target = $region13
    $region12: #{tpu_custom_call.1} parent=1 // pred_region
      %51 = dma.done [#allocation3], 256
    $region13: #{tpu_custom_call.1} parent=1 // pred_fallthru
      _
    // Predicated region
    $region14: #{tpu_custom_call.1} parent=1 // pred_check
      _
    $region15: #{tpu_custom_call.1} parent=1 // pred_check_branch
      %53 = sbr.rel (0) target = $region17
    $region16: #{tpu_custom_call.1} parent=1 // pred_region
      %54 = dma.done [#allocation6], 256
    $region17: #{tpu_custom_call.1} parent=1 // pred_fallthru
      _
    %s55 = sadd.s32 0, 0
    %p56 = scmp.lt.s32.totalorder %s55, 0
    %s57 = scalar_select %p56, %s55, 0
    %s58 = smul.u32 2, %s57
    %s59 = sadd.s32 0, 0
    %p60 = scmp.lt.s32.totalorder %s59, 0
    %s61 = scalar_select %p60, %s59, 0
    %s62 = smul.u32 2, %s61
    %p63 = scmp.eq.s32.totalorder 0, 0
    // Predicated region
    $region18: #{tpu_custom_call.1} parent=1 // pred_check
      %p64 = pneg %p63
    $region19: #{tpu_custom_call.1} parent=1 // pred_check_branch
      %66 = sbr.rel (%p64) target = $region21
    $region20: #{tpu_custom_call.1} parent=1 // pred_region
      %67 = vst [vmem:[#allocation7] sm:$0xff] 0.0
      %68 = vst [vmem:[#allocation8] sm:$0xff] 0.0
    $region21: #{tpu_custom_call.1} parent=1 // pred_fallthru
      _
    %v69 = vld [vmem:[#allocation2] sm:$0xff]
    %v70 = vld [vmem:[#allocation2 + $0x8] sm:$0xff]
    %v71 = vld [vmem:[#allocation5] sm:$0xff]
    %v72 = vld [vmem:[#allocation5 + $0x8] sm:$0xff]
    %s73 = sadd.s32 0, 0
    %s74 = smul.u32 %s73, 16
    %v75 = vlaneseq
    %v76 = vshrl.u32 %v75, 7
    %v77 = vadd.s32 %v76, 8
    %v78 = vstv %s74
    %v79 = vadd.s32 %v78, %v76
    %v80 = vadd.s32 %v78, %v77
    %v81 = vlaneseq
    %v82 = vand.u32 %v81, 127
    %vm83 = vcmp.lt.s32.totalorder %v79, 15
    %vm84 = vcmp.lt.s32.totalorder %v80, 15
    %vm85 = vcmp.eq.s32.totalorder %v79, 15
    %vm86 = vcmp.eq.s32.totalorder %v80, 15
    %vm87 = vcmp.lt.s32.totalorder %v82, 128
    %vm88 = vmand %vm85, %vm87
    %vm89 = vmand %vm86, %vm87
    %vm90 = vmor %vm83, %vm88
    %vm91 = vmor %vm84, %vm89
    %vm92 = vcmp.gt.f32.partialorder %v71, 1e-05
    %vm93 = vcmp.gt.f32.partialorder %v72, 1e-05
    %vm94 = vmand %vm90, %vm92
    %vm95 = vmand %vm91, %vm93
    %v96 = vsub.f32 %v69, %v71
    %v97 = vsub.f32 %v70, %v72
    %v98 = vand.u32 2147483647, %v96
    %v99 = vand.u32 2147483647, %v97
    %v100 = vsel %vm94, %v98, 0.0
    %v101 = vsel %vm95, %v99, 0.0
    %v102 = vsel %vm94, 1, 0
    %v103 = vsel %vm95, 1, 0
    %v104 = vcvt.s32.f32 %v102
    %v105 = vcvt.s32.f32 %v103
    %v106 = vld [vmem:[#allocation7] sm:$0xff]
    %v107 = vadd.f32 %v100, %v101
    %v108 = vadd.f32 %v106, %v107
    %109 = vst [vmem:[#allocation7] sm:$0xff] %v108
    %v110 = vld [vmem:[#allocation8] sm:$0xff]
    %v111 = vadd.f32 %v104, %v105
    %v112 = vadd.f32 %v110, %v111
    %113 = vst [vmem:[#allocation8] sm:$0xff] %v112
    // Predicated region
    $region22: #{tpu_custom_call.1} parent=1 // pred_check
      _
    $region23: #{tpu_custom_call.1} parent=1 // pred_check_branch
      %115 = sbr.rel (0) target = $region25
    $region24: #{tpu_custom_call.1} parent=1 // pred_region
      %s117 = ssub.s32 128, 128
      %118 = vsyncadd [#allocation4], %s117
      %s120 = sshll.u32 [#allocation7], 4
      %s121 = int_to_ptr.vmem [resolvable:$true] %s120
      %123 = dma.vmem_to_hbm [thread:$0]  %s121, 128, %s2, [#allocation4]
    $region25: #{tpu_custom_call.1} parent=1 // pred_fallthru
      _
    // Predicated region
    $region26: #{tpu_custom_call.1} parent=1 // pred_check
      _
    $region27: #{tpu_custom_call.1} parent=1 // pred_check_branch
      %125 = sbr.rel (0) target = $region29
    $region28: #{tpu_custom_call.1} parent=1 // pred_region
      %s127 = ssub.s32 128, 128
      %128 = vsyncadd [#allocation9], %s127
      %s130 = sshll.u32 [#allocation8], 4
      %s131 = int_to_ptr.vmem [resolvable:$true] %s130
      %133 = dma.vmem_to_hbm [thread:$0]  %s131, 128, %s3, [#allocation9]
    $region29: #{tpu_custom_call.1} parent=1 // pred_fallthru
      _
    // Predicated region
    $region30: #{tpu_custom_call.1} parent=1 // pred_check
      _
    $region31: #{tpu_custom_call.1} parent=1 // pred_check_branch
      %135 = sbr.rel (0) target = $region33
    $region32: #{tpu_custom_call.1} parent=1 // pred_region
      %136 = dma.done [#allocation4], 128
    $region33: #{tpu_custom_call.1} parent=1 // pred_fallthru
      _
    // Predicated region
    $region34: #{tpu_custom_call.1} parent=1 // pred_check
      _
    $region35: #{tpu_custom_call.1} parent=1 // pred_check_branch
      %138 = sbr.rel (0) target = $region37
    $region36: #{tpu_custom_call.1} parent=1 // pred_region
      %139 = dma.done [#allocation9], 128
    $region37: #{tpu_custom_call.1} parent=1 // pred_fallthru
      _
    %140 = vsyncpa [#allocation3], 1
    %141 = vsyncpa [#allocation6], 1
    %142 = vsyncpa [#allocation4], 1
    %143 = vsyncpa [#allocation9], 1

</llo_original>
